<compile_context>
chip_gen: v7x
topology: tpu7x:2x2x1
jax: 0.10.0
libtpu: 0.0.40
codegen_flags: <defaults>
</compile_context>

<pallas_src>
import jax
import jax.numpy as jnp
from jax.experimental import pallas as pl
from jax.experimental.pallas import tpu as pltpu


def _fused_linears_kernel(scal_ref, x_ref, o0_ref, o1_ref):
    # scal_ref: SMEM (12,) f32:
    #   [w0_00, w0_01, w0_10, w0_11, b0_0, b0_1,
    #    w1_00, w1_01, w1_10, w1_11, b1_0, b1_1]
    # x_ref : (tr, 128) f32 lane-interleaved view of the (M, 2) input:
    #          lane 2j   = feature 0 of some row,
    #          lane 2j+1 = feature 1 of the same row.
    # o*_ref: (tr, 128) f32, same interleaving, one per layer.
    v = x_ref[...]

    # Lane-parity mask, (1, 128); broadcasts along sublanes for free.
    lane = jax.lax.broadcasted_iota(jnp.int32, (1, 128), 1)
    even = (lane & 1) == 0

    # Partner-lane value: even lanes need lane+1, odd lanes need lane-1.
    # pltpu.roll follows jnp.roll semantics (result[l] = x[(l - shift) % 128]);
    # shift=127 is the in-range equivalent of -1.  Circular wrap values are
    # discarded by the parity select, so rows never mix.
    v_next = pltpu.roll(v, shift=127, axis=1)  # v[l + 1]
    v_prev = pltpu.roll(v, shift=1, axis=1)    # v[l - 1]
    v_swap = jnp.where(even, v_next, v_prev)

    def layer(o):
        w00 = scal_ref[o + 0]
        w01 = scal_ref[o + 1]
        w10 = scal_ref[o + 2]
        w11 = scal_ref[o + 3]
        b0 = scal_ref[o + 4]
        b1 = scal_ref[o + 5]
        # Per-lane coefficients: even lanes compute y0, odd lanes compute y1.
        c_diag = jnp.where(even, w00, w11)  # multiplies the same-lane feature
        c_off = jnp.where(even, w01, w10)   # multiplies the partner feature
        c_bias = jnp.where(even, b0, b1)
        return c_diag * v + c_off * v_swap + c_bias

    o0_ref[...] = layer(0).astype(o0_ref.dtype)
    o1_ref[...] = layer(6).astype(o1_ref.dtype)


# Lane-rows per block: 2048 * 128 * 4 B = 1 MiB input + 2 x 1 MiB output,
# ~6 MiB double-buffered — fits every generation's scoped-VMEM default
# (including v7x's smaller VMEM) with ample headroom.
_TR_MAX = 2048


def testm_forward(x, params):
    """Runs linears[0](x) and linears[1](x) fused in one Pallas kernel.

    Returns (None, (out0, out1)): None matches PyTorch's forward (no return
    statement); the tuple carries the two intermediate `out` tensors.
    """
    (w0, b0), (w1, b1), _unused_last_linear = params
    x = jnp.asarray(x, jnp.float32)
    M, K = x.shape
    N, K_w = w0.shape
    assert K == K_w == 2, "TestM uses Linear(2, 2): in_features must be 2"
    assert w1.shape == (N, K) and b0.shape == (N,) and b1.shape == (N,)

    # Small / ragged fast path: a Pallas launch is pure fixed overhead here
    # (and ragged M can't use the free (M,2)->(M//64,128) reinterpretation).
    if M < 1024 or M % 64 != 0:
        w_cat = jnp.concatenate([jnp.asarray(w0).T, jnp.asarray(w1).T], axis=1)
        b_cat = jnp.concatenate([jnp.asarray(b0), jnp.asarray(b1)])
        out = x @ w_cat + b_cat
        return None, (out[:, :N], out[:, N:])

    # ---- Pallas path: lane-dense, M on the lane axis -----------------------
    R = M // 64                      # lane-rows in the reinterpreted view
    xv = x.reshape(R, 128)           # free reshape: contiguous (M,2) buffer

    # 12 scalars for SMEM: [W0 row-major, b0, W1 row-major, b1].
    scal = jnp.concatenate(
        [jnp.asarray(w0).reshape(-1), jnp.asarray(b0),
         jnp.asarray(w1).reshape(-1), jnp.asarray(b1)]
    ).astype(jnp.float32)

    # Tile rows: multiple of 8, capped at _TR_MAX, and >= 2 grid steps whenever
    # the batch is big enough to split (v7x megacore sharding; neutral on
    # v5e/v6e).  Partial last blocks are handled by Pallas.
    if R <= 16:
        tr = R
    else:
        half = (R + 1) // 2
        tr = min(_TR_MAX, (half + 7) // 8 * 8)
    grid = (pl.cdiv(R, tr),)

    out0v, out1v = pl.pallas_call(
        _fused_linears_kernel,
        out_shape=(
            jax.ShapeDtypeStruct((R, 128), jnp.float32),
            jax.ShapeDtypeStruct((R, 128), jnp.float32),
        ),
        grid_spec=pltpu.PrefetchScalarGridSpec(
            num_scalar_prefetch=0,
            grid=grid,
            in_specs=[
                # 12 weight/bias scalars -> SMEM (grid-invariant).
                pl.BlockSpec(memory_space=pltpu.MemorySpace.SMEM),
                # Lane-dense input view, tiled over the lane-row axis.
                pl.BlockSpec((tr, 128), lambda i: (i, 0)),
            ],
            out_specs=[
                pl.BlockSpec((tr, 128), lambda i: (i, 0)),
                pl.BlockSpec((tr, 128), lambda i: (i, 0)),
            ],
        ),
        compiler_params=pltpu.CompilerParams(
            dimension_semantics=("parallel",),
        ),
    )(scal, xv)

    # Free reshapes back to the per-layer (M, 2) outputs.
    out0 = out0v.reshape(M, 2)
    out1 = out1v.reshape(M, 2)

    # PyTorch forward returns None (the loop result is dropped).
    return None, (out0, out1)


def init_params(key):
    """Deterministic init for three Linear(2, 2) layers (weight (2,2), bias (2,))."""
    params = []
    for i in range(3):
        kw, kb = jax.random.split(jax.random.fold_in(key, i))
        w = jax.random.normal(kw, (2, 2), jnp.float32) * 0.5
        b = jax.random.normal(kb, (2,), jnp.float32) * 0.1
        params.append((w, b))
    return tuple(params)


if __name__ == "__main__":
    key = jax.random.PRNGKey(0)
    params = init_params(key)
    (w0, b0), (w1, b1), _ = params

    # 1) Literal module-spec shape: batch of 8 rows, 2 features -> fast path.
    x_small = jax.random.normal(jax.random.fold_in(key, 100), (8, 2), jnp.float32)
    res_s, (s0, s1) = testm_forward(x_small, params)

    # 2) Batch large enough to exercise the Pallas path (still only 64 KiB).
    x_big = jax.random.normal(jax.random.fold_in(key, 101), (8192, 2), jnp.float32)
    res_b, (o0, o1) = testm_forward(x_big, params)

    jax.block_until_ready((s0, s1, o0, o1))

    # Reference checks in plain JAX (y = x @ W^T + b).
    for xc, a0, a1 in ((x_small, s0, s1), (x_big, o0, o1)):
        ref0 = xc @ w0.T + b0
        ref1 = xc @ w1.T + b1
        assert jnp.allclose(a0, ref0, atol=1e-5), "linears[0] mismatch"
        assert jnp.allclose(a1, ref1, atol=1e-5), "linears[1] mismatch"
    assert res_s is None and res_b is None

    print("KERNEL_OK")
</pallas_src>

<mosaic_0001>
module attributes {stable_mosaic.version = 11 : i64} {
  func.func @_fused_linears_kernel(%arg0: i32, %arg1: memref<12xf32, #tpu.memory_space<smem>>, %arg2: memref<64x128xf32, #tpu.memory_space<vmem>>, %arg3: memref<64x128xf32, #tpu.memory_space<vmem>>, %arg4: memref<64x128xf32, #tpu.memory_space<vmem>>) attributes {dimension_semantics = [#tpu.dimension_semantics<parallel>], iteration_bounds = array<i64: 2>, scalar_prefetch = 0 : i64, scratch_operands = 0 : i64, tpu.core_type = #tpu.core_type<tc>, window_params = [{transform_indices = @transform_0, window_bounds = array<i64: 12>}, {transform_indices = @transform_1, window_bounds = array<i64: 64, 128>}, {transform_indices = @transform_2, window_bounds = array<i64: 64, 128>}, {transform_indices = @transform_3, window_bounds = array<i64: 64, 128>}]} {
    %c0 = arith.constant 0 : index
    %c0_0 = arith.constant 0 : index
    %0 = vector.load %arg2[%c0, %c0_0] : memref<64x128xf32, #tpu.memory_space<vmem>>, vector<64x128xf32>
    %1 = tpu.iota {dimensions = array<i32: 1>} : vector<1x128xi32>
    %c1_i32 = arith.constant 1 : i32
    %2 = vector.broadcast %c1_i32 : i32 to vector<1x128xi32>
    %3 = arith.andi %1, %2 : vector<1x128xi32>
    %c0_i32 = arith.constant 0 : i32
    %4 = vector.broadcast %c0_i32 : i32 to vector<1x128xi32>
    %5 = arith.cmpi eq, %3, %4 : vector<1x128xi32>
    %c127_i32 = arith.constant 127 : i32
    %6 = tpu.dynamic_rotate %0 by %c127_i32 dim 1 : vector<64x128xf32>, i32 -> vector<64x128xf32>
    %c1_i32_1 = arith.constant 1 : i32
    %7 = tpu.dynamic_rotate %0 by %c1_i32_1 dim 1 : vector<64x128xf32>, i32 -> vector<64x128xf32>
    %8 = vector.shape_cast %5 : vector<1x128xi1> to vector<1x128xi1>
    %9 = vector.broadcast %8 : vector<1x128xi1> to vector<64x128xi1>
    %10 = arith.select %9, %6, %7 : vector<64x128xi1>, vector<64x128xf32>
    %c0_2 = arith.constant 0 : index
    %11 = memref.load %arg1[%c0_2] : memref<12xf32, #tpu.memory_space<smem>>
    %c1 = arith.constant 1 : index
    %12 = memref.load %arg1[%c1] : memref<12xf32, #tpu.memory_space<smem>>
    %c2 = arith.constant 2 : index
    %13 = memref.load %arg1[%c2] : memref<12xf32, #tpu.memory_space<smem>>
    %c3 = arith.constant 3 : index
    %14 = memref.load %arg1[%c3] : memref<12xf32, #tpu.memory_space<smem>>
    %c4 = arith.constant 4 : index
    %15 = memref.load %arg1[%c4] : memref<12xf32, #tpu.memory_space<smem>>
    %c5 = arith.constant 5 : index
    %16 = memref.load %arg1[%c5] : memref<12xf32, #tpu.memory_space<smem>>
    %17 = vector.broadcast %11 : f32 to vector<1x128xf32>
    %18 = vector.broadcast %14 : f32 to vector<1x128xf32>
    %19 = arith.select %5, %17, %18 : vector<1x128xi1>, vector<1x128xf32>
    %20 = vector.broadcast %12 : f32 to vector<1x128xf32>
    %21 = vector.broadcast %13 : f32 to vector<1x128xf32>
    %22 = arith.select %5, %20, %21 : vector<1x128xi1>, vector<1x128xf32>
    %23 = vector.broadcast %15 : f32 to vector<1x128xf32>
    %24 = vector.broadcast %16 : f32 to vector<1x128xf32>
    %25 = arith.select %5, %23, %24 : vector<1x128xi1>, vector<1x128xf32>
    %26 = vector.broadcast %19 : vector<1x128xf32> to vector<64x128xf32>
    %27 = arith.mulf %26, %0 : vector<64x128xf32>
    %28 = vector.broadcast %22 : vector<1x128xf32> to vector<64x128xf32>
    %29 = arith.mulf %28, %10 : vector<64x128xf32>
    %30 = arith.addf %27, %29 : vector<64x128xf32>
    %31 = vector.broadcast %25 : vector<1x128xf32> to vector<64x128xf32>
    %32 = arith.addf %30, %31 : vector<64x128xf32>
    %c0_3 = arith.constant 0 : index
    %c0_4 = arith.constant 0 : index
    %33 = vector.load %arg3[%c0_3, %c0_4] : memref<64x128xf32, #tpu.memory_space<vmem>>, vector<64x128xf32>
    tpu.vector_store %arg3[%c0_3, %c0_4], %32 {strides = array<i32>} : memref<64x128xf32, #tpu.memory_space<vmem>>, vector<64x128xf32>,
    %c6 = arith.constant 6 : index
    %34 = memref.load %arg1[%c6] : memref<12xf32, #tpu.memory_space<smem>>
    %c7 = arith.constant 7 : index
    %35 = memref.load %arg1[%c7] : memref<12xf32, #tpu.memory_space<smem>>
    %c8 = arith.constant 8 : index
    %36 = memref.load %arg1[%c8] : memref<12xf32, #tpu.memory_space<smem>>
    %c9 = arith.constant 9 : index
    %37 = memref.load %arg1[%c9] : memref<12xf32, #tpu.memory_space<smem>>
    %c10 = arith.constant 10 : index
    %38 = memref.load %arg1[%c10] : memref<12xf32, #tpu.memory_space<smem>>
    %c11 = arith.constant 11 : index
    %39 = memref.load %arg1[%c11] : memref<12xf32, #tpu.memory_space<smem>>
    %40 = vector.broadcast %34 : f32 to vector<1x128xf32>
    %41 = vector.broadcast %37 : f32 to vector<1x128xf32>
    %42 = arith.select %5, %40, %41 : vector<1x128xi1>, vector<1x128xf32>
    %43 = vector.broadcast %35 : f32 to vector<1x128xf32>
    %44 = vector.broadcast %36 : f32 to vector<1x128xf32>
    %45 = arith.select %5, %43, %44 : vector<1x128xi1>, vector<1x128xf32>
    %46 = vector.broadcast %38 : f32 to vector<1x128xf32>
    %47 = vector.broadcast %39 : f32 to vector<1x128xf32>
    %48 = arith.select %5, %46, %47 : vector<1x128xi1>, vector<1x128xf32>
    %49 = vector.broadcast %42 : vector<1x128xf32> to vector<64x128xf32>
    %50 = arith.mulf %49, %0 : vector<64x128xf32>
    %51 = vector.broadcast %45 : vector<1x128xf32> to vector<64x128xf32>
    %52 = arith.mulf %51, %10 : vector<64x128xf32>
    %53 = arith.addf %50, %52 : vector<64x128xf32>
    %54 = vector.broadcast %48 : vector<1x128xf32> to vector<64x128xf32>
    %55 = arith.addf %53, %54 : vector<64x128xf32>
    %c0_5 = arith.constant 0 : index
    %c0_6 = arith.constant 0 : index
    %56 = vector.load %arg4[%c0_5, %c0_6] : memref<64x128xf32, #tpu.memory_space<vmem>>, vector<64x128xf32>
    tpu.vector_store %arg4[%c0_5, %c0_6], %55 {strides = array<i32>} : memref<64x128xf32, #tpu.memory_space<vmem>>, vector<64x128xf32>,
    return
  }
  func.func @transform_0(%arg0: i32) -> i32 {
    %c0_i32 = arith.constant 0 : i32
    %c0_i32_0 = arith.constant 0 : i32
    return %c0_i32 : i32
  }
  func.func @transform_1(%arg0: i32) -> (i32, i32) {
    %c0_i32 = arith.constant 0 : i32
    %c0_i32_0 = arith.constant 0 : i32
    return %arg0, %c0_i32 : i32, i32
  }
  func.func @transform_2(%arg0: i32) -> (i32, i32) {
    %c0_i32 = arith.constant 0 : i32
    %c0_i32_0 = arith.constant 0 : i32
    return %arg0, %c0_i32 : i32, i32
  }
  func.func @transform_3(%arg0: i32) -> (i32, i32) {
    %c0_i32 = arith.constant 0 : i32
    %c0_i32_0 = arith.constant 0 : i32
    return %arg0, %c0_i32 : i32, i32
  }
}

</mosaic_0001>

<llo_original>
// kernel: tpu_custom_call.1
$region0: #{tpu_custom_call.1}
  #allocation0 [shape = 'u32[]', space=smem, size = 0x4, offset = 0x4, fixed_abs, tag = 'smem constant byte address 0x4 - core index']
  #allocation1 [shape = 'u32[144,128]{1,0:T(1,128)}', space=vmem, size = 0x12000, scoped, tag = 'internal scratch']
  %s0 = inlined_call_operand.hbm [shape: f32[12], index: 0, kind: input, shape index: {}]
  %s1 = inlined_call_operand.hbm [shape: f32[128,128], index: 1, kind: input, shape index: {}]
  %s2 = inlined_call_operand.hbm [shape: f32[128,128], index: 2, kind: output, shape index: {0}]
  %s3 = inlined_call_operand.hbm [shape: f32[128,128], index: 3, kind: output, shape index: {1}]
  %4 = xla_tuple %s2, %s3
  %s5 = sld [smem:[#allocation0]]
  $region57: #{tpu_custom_call.1} parent=0
    _
  %s7 = ssub.s32 1, %s5
  %s8 = scalar_select 0, %s7, %s5
  $region1: #{tpu_custom_call.1} parent=0
    #allocation2 [shape = 'u8[512]{0}', space=smem, size = 0x200, scoped, tag = 'input window, operand 0, single buffered']
    #allocation3 [shape = 's32[2]{0}', space=sflag, size = 0x8, scoped, tag = 'scoped memory for tpu_custom_call.1']
    #allocation4 [shape = 's32[2]{0}', space=sflag, size = 0x8, scoped, tag = 'scoped memory for tpu_custom_call.1']
    #allocation5 [shape = 's32[2]{0}', space=sflag, size = 0x8, scoped, tag = 'scoped memory for tpu_custom_call.1']
    #allocation6 [shape = 'u8[65536]{0}', space=vmem, size = 0x10000, scoped, tag = 'input window, operand 1']
    #allocation7 [shape = 'u8[65536]{0}', space=vmem, size = 0x10000, scoped, tag = 'output window, operand 0']
    #allocation8 [shape = 'u8[65536]{0}', space=vmem, size = 0x10000, scoped, tag = 'output window, operand 1']
    #allocation9 [shape = 's32[2]{0}', space=sflag, size = 0x8, scoped, tag = 'scoped memory for tpu_custom_call.1']
    %9 = vsyncpa [#allocation5], 0
    %10 = vsyncpa [#allocation3], 0
    %s11 = scalar_lea.sflag [#allocation3], 1
    %12 = vsyncpa %s11, 0
    %13 = vsyncpa [#allocation4], 0
    %s14 = scalar_lea.sflag [#allocation4], 1
    %15 = vsyncpa %s14, 0
    %16 = vsyncpa [#allocation9], 0
    %s17 = scalar_lea.sflag [#allocation9], 1
    %18 = vsyncpa %s17, 0
    loop: start=0, step=1, limit=4
    $region2: #{tpu_custom_call.1} parent=1 // loop_pre_header
      _
    $region3: #{tpu_custom_call.1} parent=1 // loop_header
      %s20 = sphi 0, %s24
      %p21 = scmp.ge.s32.totalorder %s20, 4
      %s28 = sphi 0, %s28
      %s30 = sphi 0, %s28
      %s31 = sphi 0, %s30
      %s45 = sphi 0, %s31
      %s51 = sphi 0, %s53
      %s54 = sphi 0, %s51
      %s55 = sphi 0, %s54
      %s71 = sphi 0, %s55
      %s77 = sphi 0, %s79
      %s80 = sphi 0, %s77
      %s81 = sphi 0, %s80
      %s97 = sphi 0, %s81
      %s103 = sphi 0, %s105
      %s106 = sphi 0, %s103
      %s107 = sphi 0, %s106
      %s123 = sphi 0, %s107
    $region4: #{tpu_custom_call.1} parent=1 // loop_header_branch
      %23 = sbr.rel (%p21) target = $region8
    $region5: #{tpu_custom_call.1} parent=1 // loop_body
      %s25 = ssub.s32 %s20, 1
      %s26 = ssub.s32 %s20, 2
      %s27 = sadd.s32 %s20, 1
      %s29 = sadd.s32 %s28, 1
      %p32 = scmp.eq.s32.totalorder %s20, 1
      %p33 = scmp.ne.s32.totalorder %s28, %s30
      %p34 = scmp.eq.s32.totalorder %s20, 0
      %p35 = por %p33, %p34
      %p36 = scmp.ne.s32.totalorder %s28, %s30
      %p37 = scmp.eq.s32.totalorder %s25, 1
      %p38 = por %p36, %p37
      %p39 = scmp.ne.s32.totalorder %s30, %s31
      %p40 = scmp.eq.s32.totalorder %s25, 0
      %p41 = por %p39, %p40
      %p42 = scmp.ne.s32.totalorder %s30, %s31
      %p43 = scmp.eq.s32.totalorder %s26, 1
      %p44 = por %p42, %p43
      %p46 = scmp.ne.s32.totalorder %s31, %s45
      %p47 = scmp.eq.s32.totalorder %s26, 0
      %p48 = por %p46, %p47
      %s49 = ssub.s32 %s20, %s27
      %p50 = scmp.eq.s32.totalorder %s49, 0
      %s52 = sadd.s32 %s51, 1
      %s53 = scalar_select %p50, %s51, %s52
      %p56 = pneg %p50
      %p57 = scmp.eq.s32.totalorder %s20, 1
      %p58 = por %p56, %p57
      %p59 = scmp.ne.s32.totalorder %s51, %s54
      %p60 = scmp.eq.s32.totalorder %s20, 0
      %p61 = por %p59, %p60
      %p62 = scmp.ne.s32.totalorder %s51, %s54
      %p63 = scmp.eq.s32.totalorder %s25, 1
      %p64 = por %p62, %p63
      %p65 = scmp.ne.s32.totalorder %s54, %s55
      %p66 = scmp.eq.s32.totalorder %s25, 0
      %p67 = por %p65, %p66
      %p68 = scmp.ne.s32.totalorder %s54, %s55
      %p69 = scmp.eq.s32.totalorder %s26, 1
      %p70 = por %p68, %p69
      %p72 = scmp.ne.s32.totalorder %s55, %s71
      %p73 = scmp.eq.s32.totalorder %s26, 0
      %p74 = por %p72, %p73
      %s75 = ssub.s32 %s20, %s27
      %p76 = scmp.eq.s32.totalorder %s75, 0
      %s78 = sadd.s32 %s77, 1
      %s79 = scalar_select %p76, %s77, %s78
      %p82 = pneg %p76
      %p83 = scmp.eq.s32.totalorder %s20, 1
      %p84 = por %p82, %p83
      %p85 = scmp.ne.s32.totalorder %s77, %s80
      %p86 = scmp.eq.s32.totalorder %s20, 0
      %p87 = por %p85, %p86
      %p88 = scmp.ne.s32.totalorder %s77, %s80
      %p89 = scmp.eq.s32.totalorder %s25, 1
      %p90 = por %p88, %p89
      %p91 = scmp.ne.s32.totalorder %s80, %s81
      %p92 = scmp.eq.s32.totalorder %s25, 0
      %p93 = por %p91, %p92
      %p94 = scmp.ne.s32.totalorder %s80, %s81
      %p95 = scmp.eq.s32.totalorder %s26, 1
      %p96 = por %p94, %p95
      %p98 = scmp.ne.s32.totalorder %s81, %s97
      %p99 = scmp.eq.s32.totalorder %s26, 0
      %p100 = por %p98, %p99
      %s101 = ssub.s32 %s20, %s27
      %p102 = scmp.eq.s32.totalorder %s101, 0
      %s104 = sadd.s32 %s103, 1
      %s105 = scalar_select %p102, %s103, %s104
      %p108 = pneg %p102
      %p109 = scmp.eq.s32.totalorder %s20, 1
      %p110 = por %p108, %p109
      %p111 = scmp.ne.s32.totalorder %s103, %s106
      %p112 = scmp.eq.s32.totalorder %s20, 0
      %p113 = por %p111, %p112
      %p114 = scmp.ne.s32.totalorder %s103, %s106
      %p115 = scmp.eq.s32.totalorder %s25, 1
      %p116 = por %p114, %p115
      %p117 = scmp.ne.s32.totalorder %s106, %s107
      %p118 = scmp.eq.s32.totalorder %s25, 0
      %p119 = por %p117, %p118
      %p120 = scmp.ne.s32.totalorder %s106, %s107
      %p121 = scmp.eq.s32.totalorder %s26, 1
      %p122 = por %p120, %p121
      %p124 = scmp.ne.s32.totalorder %s107, %s123
      %p125 = scmp.eq.s32.totalorder %s26, 0
      %p126 = por %p124, %p125
      %p127 = scmp.le.s32.totalorder 1, %s20
      %p128 = scmp.lt.s32.totalorder %s20, 3
      %p129 = pnand %p127, %p128
      %p130 = pneg %p129
      // Predicated region
      $region9: #{tpu_custom_call.1} parent=5 // pred_check
        _
      $region10: #{tpu_custom_call.1} parent=5 // pred_check_branch
        %132 = sbr.rel (%p129) target = $region12
      $region11: #{tpu_custom_call.1} parent=5 // pred_region
        %s133 = ssub.s32 %s20, 1
        // Predicated region
        $region13: #{tpu_custom_call.1} parent=11 // pred_check
          %p134 = pneg %p41
        $region14: #{tpu_custom_call.1} parent=11 // pred_check_branch
          %136 = sbr.rel (%p134) target = $region16
        $region15: #{tpu_custom_call.1} parent=11 // pred_region
          %s138 = ssub.s32 16, 16
          %139 = vsyncadd [#allocation5], %s138
          %142 = dma.hbm_to_smem %s0, 16, [#allocation2], [#allocation5]
        $region16: #{tpu_custom_call.1} parent=11 // pred_fallthru
          _
      $region12: #{tpu_custom_call.1} parent=5 // pred_fallthru
        _
      %p143 = scmp.lt.s32.totalorder %s20, 2
      // Predicated region
      $region17: #{tpu_custom_call.1} parent=5 // pred_check
        %p144 = pneg %p143
      $region18: #{tpu_custom_call.1} parent=5 // pred_check_branch
        %146 = sbr.rel (%p144) target = $region20
      $region19: #{tpu_custom_call.1} parent=5 // pred_region
        // Predicated region
        $region21: #{tpu_custom_call.1} parent=19 // pred_check
          %p147 = pneg %p61
        $region22: #{tpu_custom_call.1} parent=19 // pred_check_branch
          %149 = sbr.rel (%p147) target = $region24
        $region23: #{tpu_custom_call.1} parent=19 // pred_region
          %s150 = sand.u32 %s51, 1
          %s151 = scalar_lea.sflag [#allocation3], %s150
          %s152 = sand.u32 %s51, 1
          %s153 = smul.addr %s152, 64
          %s154 = scalar_lea.vmem [#allocation6], %s153
          %s155 = smul.u32 8, %s20
          %s157 = ssub.s32 1024, 1024
          %158 = vsyncadd %s151, %s157
          %s159 = smul.addr %s155, 128
          %s160 = scalar_lea.hbm %s1, %s159
          %s161 = sshll.u32 %s154, 4
          %s162 = int_to_ptr.vmem [resolvable:$true] %s161
          %167 = dma.hbm_to_vmem [thread:$0]  %s160, 1024, %s162, %s151, 128, 128, 8
        $region24: #{tpu_custom_call.1} parent=19 // pred_fallthru
          _
      $region20: #{tpu_custom_call.1} parent=5 // pred_fallthru
        _
      %p168 = scmp.le.s32.totalorder 1, %s20
      %p169 = scmp.lt.s32.totalorder %s20, 3
      %p170 = pnand %p168, %p169
      %p171 = pneg %p170
      // Predicated region
      $region25: #{tpu_custom_call.1} parent=5 // pred_check
        _
      $region26: #{tpu_custom_call.1} parent=5 // pred_check_branch
        %173 = sbr.rel (%p170) target = $region28
      $region27: #{tpu_custom_call.1} parent=5 // pred_region
        %s174 = ssub.s32 %s20, 1
        // Predicated region
        $region29: #{tpu_custom_call.1} parent=27 // pred_check
          %p175 = pneg %p41
        $region30: #{tpu_custom_call.1} parent=27 // pred_check_branch
          %177 = sbr.rel (%p175) target = $region32
        $region31: #{tpu_custom_call.1} parent=27 // pred_region
          %178 = dma.done [#allocation5], 16
        $region32: #{tpu_custom_call.1} parent=27 // pred_fallthru
          _
        %s179 = sand.u32 %s54, 1
        %s180 = scalar_lea.sflag [#allocation3], %s179
        %s181 = sand.u32 %s54, 1
        %s182 = smul.addr %s181, 64
        %s183 = scalar_lea.vmem [#allocation6], %s182
        // Predicated region
        $region33: #{tpu_custom_call.1} parent=27 // pred_check
          %p184 = pneg %p67
        $region34: #{tpu_custom_call.1} parent=27 // pred_check_branch
          %186 = sbr.rel (%p184) target = $region36
        $region35: #{tpu_custom_call.1} parent=27 // pred_region
          %187 = dma.done %s180, 1024
        $region36: #{tpu_custom_call.1} parent=27 // pred_fallthru
          _
        %188 = sfence
        %p189 = pneg %p41
        %p190 = pneg %p38
        %s191 = sand.u32 %s54, 1
        %s192 = scalar_lea.sflag [#allocation3], %s191
        %s193 = sand.u32 %s54, 1
        %s194 = smul.addr %s193, 64
        %s195 = scalar_lea.vmem [#allocation6], %s194
        %p196 = pneg %p67
        %p197 = pneg %p64
        %p198 = pneg %p93
        %p199 = pneg %p90
        %s200 = sand.u32 %s80, 1
        %s201 = scalar_lea.sflag [#allocation4], %s200
        %s202 = sand.u32 %s80, 1
        %s203 = smul.addr %s202, 64
        %s204 = scalar_lea.vmem [#allocation7], %s203
        %p205 = pneg %p119
        %p206 = pneg %p116
        %s207 = sand.u32 %s106, 1
        %s208 = scalar_lea.sflag [#allocation9], %s207
        %s209 = sand.u32 %s106, 1
        %s210 = smul.addr %s209, 64
        %s211 = scalar_lea.vmem [#allocation8], %s210
        %s212 = smul.u32 8, %s25
        %s213 = smul.u32 8, %s25
        %s214 = smul.u32 8, %s25
        %v215 = vld [vmem:[%s183] sm:$0xff]
        %v216 = vld [vmem:[%s183 + $0x8] sm:$0xff]
        %v217 = vld [vmem:[%s183 + $0x10] sm:$0xff]
        %v218 = vld [vmem:[%s183 + $0x18] sm:$0xff]
        %v219 = vld [vmem:[%s183 + $0x20] sm:$0xff]
        %v220 = vld [vmem:[%s183 + $0x28] sm:$0xff]
        %v221 = vld [vmem:[%s183 + $0x30] sm:$0xff]
        %v222 = vld [vmem:[%s183 + $0x38] sm:$0xff]
        %v223 = vlaneseq
        %v224 = vand.u32 %v223, 127
        %v225 = vand.u32 %v224, 1
        %vm226 = vcmp.eq.s32.totalorder %v225, 0
        %227 = vrot.lane.b32.xlu0 %v215, 127
        %v228 = vpop.permute.xlu0 %227
        %229 = vrot.lane.b32.xlu0 %v216, 127
        %v230 = vpop.permute.xlu0 %229
        %231 = vrot.lane.b32.xlu0 %v217, 127
        %v232 = vpop.permute.xlu0 %231
        %233 = vrot.lane.b32.xlu0 %v218, 127
        %v234 = vpop.permute.xlu0 %233
        %235 = vrot.lane.b32.xlu0 %v219, 127
        %v236 = vpop.permute.xlu0 %235
        %237 = vrot.lane.b32.xlu0 %v220, 127
        %v238 = vpop.permute.xlu0 %237
        %239 = vrot.lane.b32.xlu0 %v221, 127
        %v240 = vpop.permute.xlu0 %239
        %241 = vrot.lane.b32.xlu0 %v222, 127
        %v242 = vpop.permute.xlu0 %241
        %243 = vrot.lane.b32.xlu0 %v215, 1
        %v244 = vpop.permute.xlu0 %243
        %245 = vrot.lane.b32.xlu0 %v216, 1
        %v246 = vpop.permute.xlu0 %245
        %247 = vrot.lane.b32.xlu0 %v217, 1
        %v248 = vpop.permute.xlu0 %247
        %249 = vrot.lane.b32.xlu0 %v218, 1
        %v250 = vpop.permute.xlu0 %249
        %251 = vrot.lane.b32.xlu0 %v219, 1
        %v252 = vpop.permute.xlu0 %251
        %253 = vrot.lane.b32.xlu0 %v220, 1
        %v254 = vpop.permute.xlu0 %253
        %255 = vrot.lane.b32.xlu0 %v221, 1
        %v256 = vpop.permute.xlu0 %255
        %257 = vrot.lane.b32.xlu0 %v222, 1
        %v258 = vpop.permute.xlu0 %257
        %v259 = vsel %vm226, 1, 0
        %vm260 = vcmp.eq.s32.totalorder %v259, 1
        %v261 = vsel %vm260, %v228, %v244
        %v262 = vsel %vm260, %v230, %v246
        %v263 = vsel %vm260, %v232, %v248
        %v264 = vsel %vm260, %v234, %v250
        %v265 = vsel %vm260, %v236, %v252
        %v266 = vsel %vm260, %v238, %v254
        %v267 = vsel %vm260, %v240, %v256
        %v268 = vsel %vm260, %v242, %v258
        %s269 = sld [smem:[#allocation2]]
        %s270 = sld [smem:[#allocation2 + $0x1]]
        %s271 = sld [smem:[#allocation2 + $0x2]]
        %s272 = sld [smem:[#allocation2 + $0x3]]
        %s273 = sld [smem:[#allocation2 + $0x4]]
        %s274 = sld [smem:[#allocation2 + $0x5]]
        %v275 = vstv %s269
        %v276 = vstv %s272
        %v277 = vsel %vm226, %v275, %v276
        %v278 = vstv %s270
        %v279 = vstv %s271
        %v280 = vsel %vm226, %v278, %v279
        %v281 = vstv %s273
        %v282 = vstv %s274
        %v283 = vsel %vm226, %v281, %v282
        %v284 = vmul.f32 %v277, %v215
        %v285 = vmul.f32 %v277, %v216
        %v286 = vmul.f32 %v277, %v217
        %v287 = vmul.f32 %v277, %v218
        %v288 = vmul.f32 %v277, %v219
        %v289 = vmul.f32 %v277, %v220
        %v290 = vmul.f32 %v277, %v221
        %v291 = vmul.f32 %v277, %v222
        %v292 = vmul.f32 %v280, %v261
        %v293 = vmul.f32 %v280, %v262
        %v294 = vmul.f32 %v280, %v263
        %v295 = vmul.f32 %v280, %v264
        %v296 = vmul.f32 %v280, %v265
        %v297 = vmul.f32 %v280, %v266
        %v298 = vmul.f32 %v280, %v267
        %v299 = vmul.f32 %v280, %v268
        %v300 = vadd.f32 %v284, %v292
        %v301 = vadd.f32 %v285, %v293
        %v302 = vadd.f32 %v286, %v294
        %v303 = vadd.f32 %v287, %v295
        %v304 = vadd.f32 %v288, %v296
        %v305 = vadd.f32 %v289, %v297
        %v306 = vadd.f32 %v290, %v298
        %v307 = vadd.f32 %v291, %v299
        %v308 = vadd.f32 %v300, %v283
        %v309 = vadd.f32 %v301, %v283
        %v310 = vadd.f32 %v302, %v283
        %v311 = vadd.f32 %v303, %v283
        %v312 = vadd.f32 %v304, %v283
        %v313 = vadd.f32 %v305, %v283
        %v314 = vadd.f32 %v306, %v283
        %v315 = vadd.f32 %v307, %v283
        %316 = vst [vmem:[%s204] sm:$0xff] %v308
        %317 = vst [vmem:[%s204 + $0x8] sm:$0xff] %v309
        %318 = vst [vmem:[%s204 + $0x10] sm:$0xff] %v310
        %319 = vst [vmem:[%s204 + $0x18] sm:$0xff] %v311
        %320 = vst [vmem:[%s204 + $0x20] sm:$0xff] %v312
        %321 = vst [vmem:[%s204 + $0x28] sm:$0xff] %v313
        %322 = vst [vmem:[%s204 + $0x30] sm:$0xff] %v314
        %323 = vst [vmem:[%s204 + $0x38] sm:$0xff] %v315
        %s324 = sld [smem:[#allocation2 + $0x6]]
        %s325 = sld [smem:[#allocation2 + $0x7]]
        %s326 = sld [smem:[#allocation2 + $0x8]]
        %s327 = sld [smem:[#allocation2 + $0x9]]
        %s328 = sld [smem:[#allocation2 + $0xa]]
        %s329 = sld [smem:[#allocation2 + $0xb]]
        %v330 = vstv %s324
        %v331 = vstv %s327
        %v332 = vsel %vm226, %v330, %v331
        %v333 = vstv %s325
        %v334 = vstv %s326
        %v335 = vsel %vm226, %v333, %v334
        %v336 = vstv %s328
        %v337 = vstv %s329
        %v338 = vsel %vm226, %v336, %v337
        %v339 = vmul.f32 %v332, %v215
        %v340 = vmul.f32 %v332, %v216
        %v341 = vmul.f32 %v332, %v217
        %v342 = vmul.f32 %v332, %v218
        %v343 = vmul.f32 %v332, %v219
        %v344 = vmul.f32 %v332, %v220
        %v345 = vmul.f32 %v332, %v221
        %v346 = vmul.f32 %v332, %v222
        %v347 = vmul.f32 %v335, %v261
        %v348 = vmul.f32 %v335, %v262
        %v349 = vmul.f32 %v335, %v263
        %v350 = vmul.f32 %v335, %v264
        %v351 = vmul.f32 %v335, %v265
        %v352 = vmul.f32 %v335, %v266
        %v353 = vmul.f32 %v335, %v267
        %v354 = vmul.f32 %v335, %v268
        %v355 = vadd.f32 %v339, %v347
        %v356 = vadd.f32 %v340, %v348
        %v357 = vadd.f32 %v341, %v349
        %v358 = vadd.f32 %v342, %v350
        %v359 = vadd.f32 %v343, %v351
        %v360 = vadd.f32 %v344, %v352
        %v361 = vadd.f32 %v345, %v353
        %v362 = vadd.f32 %v346, %v354
        %v363 = vadd.f32 %v355, %v338
        %v364 = vadd.f32 %v356, %v338
        %v365 = vadd.f32 %v357, %v338
        %v366 = vadd.f32 %v358, %v338
        %v367 = vadd.f32 %v359, %v338
        %v368 = vadd.f32 %v360, %v338
        %v369 = vadd.f32 %v361, %v338
        %v370 = vadd.f32 %v362, %v338
        %371 = vst [vmem:[%s211] sm:$0xff] %v363
        %372 = vst [vmem:[%s211 + $0x8] sm:$0xff] %v364
        %373 = vst [vmem:[%s211 + $0x10] sm:$0xff] %v365
        %374 = vst [vmem:[%s211 + $0x18] sm:$0xff] %v366
        %375 = vst [vmem:[%s211 + $0x20] sm:$0xff] %v367
        %376 = vst [vmem:[%s211 + $0x28] sm:$0xff] %v368
        %377 = vst [vmem:[%s211 + $0x30] sm:$0xff] %v369
        %378 = vst [vmem:[%s211 + $0x38] sm:$0xff] %v370
        %s379 = sand.u32 %s80, 1
        %s380 = scalar_lea.sflag [#allocation4], %s379
        %s381 = sand.u32 %s80, 1
        %s382 = smul.addr %s381, 64
        %s383 = scalar_lea.vmem [#allocation7], %s382
        %s384 = sand.u32 %s106, 1
        %s385 = scalar_lea.sflag [#allocation9], %s384
        %s386 = sand.u32 %s106, 1
        %s387 = smul.addr %s386, 64
        %s388 = scalar_lea.vmem [#allocation8], %s387
        // Predicated region
        $region37: #{tpu_custom_call.1} parent=27 // pred_check
          %p389 = pneg %p90
        $region38: #{tpu_custom_call.1} parent=27 // pred_check_branch
          %391 = sbr.rel (%p389) target = $region40
        $region39: #{tpu_custom_call.1} parent=27 // pred_region
          %s392 = smul.u32 8, %s25
          %s394 = ssub.s32 1024, 1024
          %395 = vsyncadd %s380, %s394
          %s396 = smul.addr %s392, 128
          %s397 = scalar_lea.hbm %s2, %s396
          %s398 = sshll.u32 %s383, 4
          %s399 = int_to_ptr.vmem [resolvable:$true] %s398
          %404 = dma.vmem_to_hbm [thread:$0]  %s399, 1024, %s397, %s380, 128, 128, 8
        $region40: #{tpu_custom_call.1} parent=27 // pred_fallthru
          _
        // Predicated region
        $region41: #{tpu_custom_call.1} parent=27 // pred_check
          %p405 = pneg %p116
        $region42: #{tpu_custom_call.1} parent=27 // pred_check_branch
          %407 = sbr.rel (%p405) target = $region44
        $region43: #{tpu_custom_call.1} parent=27 // pred_region
          %s408 = smul.u32 8, %s25
          %s410 = ssub.s32 1024, 1024
          %411 = vsyncadd %s385, %s410
          %s412 = smul.addr %s408, 128
          %s413 = scalar_lea.hbm %s3, %s412
          %s414 = sshll.u32 %s388, 4
          %s415 = int_to_ptr.vmem [resolvable:$true] %s414
          %420 = dma.vmem_to_hbm [thread:$0]  %s415, 1024, %s413, %s385, 128, 128, 8
        $region44: #{tpu_custom_call.1} parent=27 // pred_fallthru
          _
      $region28: #{tpu_custom_call.1} parent=5 // pred_fallthru
        _
      %p421 = scmp.le.s32.totalorder 2, %s20
      // Predicated region
      $region45: #{tpu_custom_call.1} parent=5 // pred_check
        %p422 = pneg %p421
      $region46: #{tpu_custom_call.1} parent=5 // pred_check_branch
        %424 = sbr.rel (%p422) target = $region48
      $region47: #{tpu_custom_call.1} parent=5 // pred_region
        %s425 = ssub.s32 %s20, 2
        // Predicated region
        $region49: #{tpu_custom_call.1} parent=47 // pred_check
          %p426 = pneg %p96
        $region50: #{tpu_custom_call.1} parent=47 // pred_check_branch
          %428 = sbr.rel (%p426) target = $region52
        $region51: #{tpu_custom_call.1} parent=47 // pred_region
          %s429 = sand.u32 %s81, 1
          %s430 = scalar_lea.sflag [#allocation4], %s429
          %s431 = sand.u32 %s81, 1
          %s432 = smul.addr %s431, 64
          %s433 = scalar_lea.vmem [#allocation7], %s432
          %434 = dma.done %s430, 1024
        $region52: #{tpu_custom_call.1} parent=47 // pred_fallthru
          _
        // Predicated region
        $region53: #{tpu_custom_call.1} parent=47 // pred_check
          %p435 = pneg %p122
        $region54: #{tpu_custom_call.1} parent=47 // pred_check_branch
          %437 = sbr.rel (%p435) target = $region56
        $region55: #{tpu_custom_call.1} parent=47 // pred_region
          %s438 = sand.u32 %s107, 1
          %s439 = scalar_lea.sflag [#allocation9], %s438
          %s440 = sand.u32 %s107, 1
          %s441 = smul.addr %s440, 64
          %s442 = scalar_lea.vmem [#allocation8], %s441
          %443 = dma.done %s439, 1024
        $region56: #{tpu_custom_call.1} parent=47 // pred_fallthru
          _
      $region48: #{tpu_custom_call.1} parent=5 // pred_fallthru
        _
    $region6: #{tpu_custom_call.1} parent=1 // loop_footer
      %s24 = sadd.s32 1, %s20
    $region7: #{tpu_custom_call.1} parent=1 // loop_footer_branch
      %19 = sbr.rel target = $region3
    $region8: #{tpu_custom_call.1} parent=1 // loop_exit
      _
    %444 = vsyncpa [#allocation3], 1
    %s445 = scalar_lea.sflag [#allocation3], 1
    %446 = vsyncpa %s445, 1
    %447 = vsyncpa [#allocation4], 1
    %s448 = scalar_lea.sflag [#allocation4], 1
    %449 = vsyncpa %s448, 1
    %450 = vsyncpa [#allocation9], 1
    %s451 = scalar_lea.sflag [#allocation9], 1
    %452 = vsyncpa %s451, 1
    %453 = vsyncpa [#allocation5], 1
    %s454 = scalar_lea.sflag [#allocation5], 1
    %455 = vsyncpa %s454, 1

</llo_original>
